<compile_context>
chip_gen: v6e
topology: v6e:2x2x1
jax: 0.10.0
libtpu: 0.0.40
codegen_flags: <defaults>
</compile_context>

<pallas_src>
import functools

import jax
import jax.numpy as jnp
from jax.experimental import pallas as pl
from jax.experimental.pallas import tpu as pltpu

HIDDEN = 100          # logical hidden width of the PyTorch model
HPAD = 128            # lane-aligned hidden width used by the kernel
APAD = 128            # lane-aligned fused-head width (policy logits + value + pad)
NEG_INF = -1e30       # finite "minus infinity" for masked pad logits


def _round_up(x, m):
    return ((x + m - 1) // m) * m


def _ppo_forward_kernel(state_ref, gumbel_ref, w1_ref, b1_ref, w2_ref, b2_ref,
                        wh_ref, bh_ref, out_ref, *, action_dim):
    # Shared body: Linear(S,100) -> ReLU -> Linear(100,100) -> ReLU (padded to 128).
    x = state_ref[...]                                                  # (TB, S) bf16
    h1 = jnp.maximum(
        jnp.dot(x, w1_ref[...], preferred_element_type=jnp.float32) + b1_ref[...],
        0.0)
    h2 = jnp.maximum(
        jnp.dot(h1.astype(w2_ref.dtype), w2_ref[...],
                preferred_element_type=jnp.float32) + b2_ref[...],
        0.0)

    # Fused heads: columns [0, A) are policy logits, column A is the value,
    # columns (A, 128) are zero padding.
    fused = jnp.dot(h2.astype(wh_ref.dtype), wh_ref[...],
                    preferred_element_type=jnp.float32) + bh_ref[...]   # (TB, 128)

    col = jax.lax.broadcasted_iota(jnp.int32, fused.shape, 1)
    logits = jnp.where(col < action_dim, fused, NEG_INF)
    value = jnp.sum(jnp.where(col == action_dim, fused, 0.0),
                    axis=-1, keepdims=True)                             # (TB, 1)

    # log-softmax pieces in f32 (single exp pass + single log -> minimal EUP work).
    m = jnp.max(logits, axis=-1, keepdims=True)
    lse = m + jnp.log(jnp.sum(jnp.exp(logits - m), axis=-1, keepdims=True))

    # Categorical(softmax(logits)).sample() via the Gumbel-max trick.
    noisy = logits + gumbel_ref[...]
    mx = jnp.max(noisy, axis=-1, keepdims=True)
    action = jnp.min(jnp.where(noisy == mx, col, APAD),
                     axis=-1, keepdims=True)                            # (TB, 1) int32

    # log_prob(action) = logits[action] - logsumexp(logits)  (one-hot gather).
    sel = jnp.sum(jnp.where(col == action, fused, 0.0), axis=-1, keepdims=True)
    logp = sel - lse

    # Lane-dense packed output: col0 = value, col1 = log_prob, col2 = action.
    action_f = action.astype(jnp.float32)
    out_ref[...] = (jnp.where(col == 0, value, 0.0)
                    + jnp.where(col == 1, logp, 0.0)
                    + jnp.where(col == 2, action_f, 0.0))


def init_params(key, state_dim, action_dim):
    """PyTorch nn.Linear-style init, then packed into the padded/fused kernel layout."""
    def linear(k, fan_in, fan_out):
        kw, kb = jax.random.split(k)
        bound = 1.0 / jnp.sqrt(jnp.float32(fan_in))
        w = jax.random.uniform(kw, (fan_in, fan_out), jnp.float32, -bound, bound)
        b = jax.random.uniform(kb, (fan_out,), jnp.float32, -bound, bound)
        return w, b

    k1, k2, k3, k4 = jax.random.split(key, 4)
    w1, b1 = linear(k1, state_dim, HIDDEN)       # body[0]
    w2, b2 = linear(k2, HIDDEN, HIDDEN)          # body[2]
    wpi, bpi = linear(k3, HIDDEN, action_dim)    # policy head
    wv, bv = linear(k4, HIDDEN, 1)               # value head

    w1_p = jnp.zeros((state_dim, HPAD), jnp.float32).at[:, :HIDDEN].set(w1)
    b1_p = jnp.zeros((1, HPAD), jnp.float32).at[0, :HIDDEN].set(b1)
    w2_p = jnp.zeros((HPAD, HPAD), jnp.float32).at[:HIDDEN, :HIDDEN].set(w2)
    b2_p = jnp.zeros((1, HPAD), jnp.float32).at[0, :HIDDEN].set(b2)
    wh_p = (jnp.zeros((HPAD, APAD), jnp.float32)
            .at[:HIDDEN, :action_dim].set(wpi)
            .at[:HIDDEN, action_dim].set(wv[:, 0]))
    bh_p = (jnp.zeros((1, APAD), jnp.float32)
            .at[0, :action_dim].set(bpi)
            .at[0, action_dim].set(bv[0]))

    return dict(w1=w1_p.astype(jnp.bfloat16), b1=b1_p,
                w2=w2_p.astype(jnp.bfloat16), b2=b2_p,
                w_head=wh_p.astype(jnp.bfloat16), b_head=bh_p,
                action_dim=action_dim)


def ppo_policy_discrete_forward(state, params, gumbel):
    """Returns (value, action, log_prob), each of shape (B,)."""
    B, S = state.shape
    A = int(params["action_dim"])

    # Batch tile: big enough to hide DMA at large batch, 8-aligned at small batch.
    TB = 512 if B > 512 else _round_up(B, 8)
    B_pad = _round_up(B, TB)
    grid = (B_pad // TB,)

    state_p = jnp.zeros((B_pad, S), jnp.bfloat16).at[:B].set(state.astype(jnp.bfloat16))
    gumbel_p = jnp.zeros((B_pad, APAD), jnp.float32).at[:B, :A].set(gumbel)

    in_specs = [
        pl.BlockSpec((TB, S), lambda i: (i, 0)),          # state (row-tiled)
        pl.BlockSpec((TB, APAD), lambda i: (i, 0)),       # gumbel (row-tiled)
        pl.BlockSpec((S, HPAD), lambda i: (0, 0)),        # w1 (resident)
        pl.BlockSpec((1, HPAD), lambda i: (0, 0)),        # b1
        pl.BlockSpec((HPAD, HPAD), lambda i: (0, 0)),     # w2
        pl.BlockSpec((1, HPAD), lambda i: (0, 0)),        # b2
        pl.BlockSpec((HPAD, APAD), lambda i: (0, 0)),     # fused head weight
        pl.BlockSpec((1, APAD), lambda i: (0, 0)),        # fused head bias
    ]
    out_spec = pl.BlockSpec((TB, APAD), lambda i: (i, 0))
    out_shape = jax.ShapeDtypeStruct((B_pad, APAD), jnp.float32)

    weights_bytes = sum(int(params[k].nbytes)
                        for k in ("w1", "b1", "w2", "b2", "w_head", "b_head"))
    cost = pl.CostEstimate(
        flops=2 * B_pad * (S * HPAD + HPAD * HPAD + HPAD * APAD),
        transcendentals=B_pad * (APAD + 1),
        bytes_accessed=int(state_p.nbytes + gumbel_p.nbytes
                           + weights_bytes + B_pad * APAD * 4),
    )

    kernel = functools.partial(_ppo_forward_kernel, action_dim=A)

    packed = pl.pallas_call(
        kernel,
        grid_spec=pltpu.PrefetchScalarGridSpec(
            num_scalar_prefetch=0,
            grid=grid,
            in_specs=in_specs,
            out_specs=out_spec,
        ),
        out_shape=out_shape,
        compiler_params=pltpu.CompilerParams(
            dimension_semantics=("parallel",),      # shards batch tiles over v7x's 2 TCs
            vmem_limit_bytes=32 * 1024 * 1024,      # safe on v5e/v6e/v7x at these tiles
        ),
        cost_estimate=cost,
    )(state_p, gumbel_p,
      params["w1"], params["b1"], params["w2"], params["b2"],
      params["w_head"], params["b_head"])

    packed = packed[:B]
    value = packed[:, 0]
    log_prob = packed[:, 1]
    action = packed[:, 2].astype(jnp.int32)
    # PyTorch .squeeze() semantics on a batched forward -> shape (B,).
    return value, action, log_prob


# TODO(synk): only the stochastic=True forward path is implemented (deterministic
# argmax path and evaluate() would be small variations of the same kernel).

if __name__ == "__main__":
    state_dim, action_dim, batch = 32, 6, 4

    key = jax.random.PRNGKey(0)
    k_params, k_state, k_gumbel = jax.random.split(key, 3)

    params = init_params(k_params, state_dim, action_dim)
    state = jax.random.normal(k_state, (batch, state_dim), jnp.float32)
    # Deterministic Gumbel noise drives Categorical sampling (stochastic=True path).
    gumbel = jax.random.gumbel(k_gumbel, (batch, action_dim), jnp.float32)

    value, action, log_prob = ppo_policy_discrete_forward(state, params, gumbel)
    jax.block_until_ready((value, action, log_prob))

    assert value.shape == (batch,)
    assert action.shape == (batch,)
    assert log_prob.shape == (batch,)
    assert bool(jnp.all(log_prob <= 0.0))
    assert bool(jnp.all((action >= 0) & (action < action_dim)))

    print("KERNEL_OK")
</pallas_src>

<mosaic_0001>
module attributes {stable_mosaic.version = 11 : i64} {
  func.func @_ppo_forward_kernel(%arg0: i32, %arg1: memref<8x32xbf16, #tpu.memory_space<vmem>>, %arg2: memref<8x128xf32, #tpu.memory_space<vmem>>, %arg3: memref<32x128xbf16, #tpu.memory_space<vmem>>, %arg4: memref<1x128xf32, #tpu.memory_space<vmem>>, %arg5: memref<128x128xbf16, #tpu.memory_space<vmem>>, %arg6: memref<1x128xf32, #tpu.memory_space<vmem>>, %arg7: memref<128x128xbf16, #tpu.memory_space<vmem>>, %arg8: memref<1x128xf32, #tpu.memory_space<vmem>>, %arg9: memref<8x128xf32, #tpu.memory_space<vmem>>) attributes {dimension_semantics = [#tpu.dimension_semantics<parallel>], iteration_bounds = array<i64: 1>, scalar_prefetch = 0 : i64, scratch_operands = 0 : i64, tpu.core_type = #tpu.core_type<tc>, window_params = [{transform_indices = @transform_0, window_bounds = array<i64: 8, 32>}, {transform_indices = @transform_1, window_bounds = array<i64: 8, 128>}, {pipeline_mode = #tpu.pipeline_mode<synchronous>, transform_indices = @transform_2, window_bounds = array<i64: 32, 128>}, {pipeline_mode = #tpu.pipeline_mode<synchronous>, transform_indices = @transform_3, window_bounds = array<i64: 1, 128>}, {pipeline_mode = #tpu.pipeline_mode<synchronous>, transform_indices = @transform_4, window_bounds = array<i64: 128, 128>}, {pipeline_mode = #tpu.pipeline_mode<synchronous>, transform_indices = @transform_5, window_bounds = array<i64: 1, 128>}, {pipeline_mode = #tpu.pipeline_mode<synchronous>, transform_indices = @transform_6, window_bounds = array<i64: 128, 128>}, {pipeline_mode = #tpu.pipeline_mode<synchronous>, transform_indices = @transform_7, window_bounds = array<i64: 1, 128>}, {transform_indices = @transform_8, window_bounds = array<i64: 8, 128>}]} {
    %c0 = arith.constant 0 : index
    %c0_0 = arith.constant 0 : index
    %0 = vector.load %arg1[%c0, %c0_0] : memref<8x32xbf16, #tpu.memory_space<vmem>>, vector<8x32xbf16>
    %c0_1 = arith.constant 0 : index
    %c0_2 = arith.constant 0 : index
    %1 = vector.load %arg3[%c0_1, %c0_2] : memref<32x128xbf16, #tpu.memory_space<vmem>>, vector<32x128xbf16>
    %cst = arith.constant dense<0.000000e+00> : vector<8x128xf32>
    %2 = tpu.matmul %0, %1, %cst {dimension_numbers = #tpu.dot_dimension_numbers<[1], [0], [0], [1], [0, 0, 1, 1], [], []>} : vector<8x32xbf16>, vector<32x128xbf16>, vector<8x128xf32> -> vector<8x128xf32>
    %c0_3 = arith.constant 0 : index
    %c0_4 = arith.constant 0 : index
    %3 = vector.load %arg4[%c0_3, %c0_4] : memref<1x128xf32, #tpu.memory_space<vmem>>, vector<1x128xf32>
    %4 = vector.broadcast %3 : vector<1x128xf32> to vector<8x128xf32>
    %5 = arith.addf %2, %4 : vector<8x128xf32>
    %cst_5 = arith.constant 0.000000e+00 : f32
    %6 = vector.broadcast %cst_5 : f32 to vector<8x128xf32>
    %7 = arith.maximumf %5, %6 : vector<8x128xf32>
    %8 = arith.truncf %7 : vector<8x128xf32> to vector<8x128xbf16>
    %c0_6 = arith.constant 0 : index
    %c0_7 = arith.constant 0 : index
    %9 = vector.load %arg5[%c0_6, %c0_7] : memref<128x128xbf16, #tpu.memory_space<vmem>>, vector<128x128xbf16>
    %cst_8 = arith.constant dense<0.000000e+00> : vector<8x128xf32>
    %10 = tpu.matmul %8, %9, %cst_8 {dimension_numbers = #tpu.dot_dimension_numbers<[1], [0], [0], [1], [0, 0, 1, 1], [], []>} : vector<8x128xbf16>, vector<128x128xbf16>, vector<8x128xf32> -> vector<8x128xf32>
    %c0_9 = arith.constant 0 : index
    %c0_10 = arith.constant 0 : index
    %11 = vector.load %arg6[%c0_9, %c0_10] : memref<1x128xf32, #tpu.memory_space<vmem>>, vector<1x128xf32>
    %12 = vector.broadcast %11 : vector<1x128xf32> to vector<8x128xf32>
    %13 = arith.addf %10, %12 : vector<8x128xf32>
    %cst_11 = arith.constant 0.000000e+00 : f32
    %14 = vector.broadcast %cst_11 : f32 to vector<8x128xf32>
    %15 = arith.maximumf %13, %14 : vector<8x128xf32>
    %16 = arith.truncf %15 : vector<8x128xf32> to vector<8x128xbf16>
    %c0_12 = arith.constant 0 : index
    %c0_13 = arith.constant 0 : index
    %17 = vector.load %arg7[%c0_12, %c0_13] : memref<128x128xbf16, #tpu.memory_space<vmem>>, vector<128x128xbf16>
    %cst_14 = arith.constant dense<0.000000e+00> : vector<8x128xf32>
    %18 = tpu.matmul %16, %17, %cst_14 {dimension_numbers = #tpu.dot_dimension_numbers<[1], [0], [0], [1], [0, 0, 1, 1], [], []>} : vector<8x128xbf16>, vector<128x128xbf16>, vector<8x128xf32> -> vector<8x128xf32>
    %c0_15 = arith.constant 0 : index
    %c0_16 = arith.constant 0 : index
    %19 = vector.load %arg8[%c0_15, %c0_16] : memref<1x128xf32, #tpu.memory_space<vmem>>, vector<1x128xf32>
    %20 = vector.broadcast %19 : vector<1x128xf32> to vector<8x128xf32>
    %21 = arith.addf %18, %20 : vector<8x128xf32>
    %22 = tpu.iota {dimensions = array<i32: 1>} : vector<8x128xi32>
    %c6_i32 = arith.constant 6 : i32
    %23 = vector.broadcast %c6_i32 : i32 to vector<8x128xi32>
    %24 = arith.cmpi slt, %22, %23 : vector<8x128xi32>
    %cst_17 = arith.constant -1.000000e+30 : f32
    %25 = vector.broadcast %cst_17 : f32 to vector<8x128xf32>
    %26 = arith.select %24, %21, %25 : vector<8x128xi1>, vector<8x128xf32>
    %c6_i32_18 = arith.constant 6 : i32
    %27 = vector.broadcast %c6_i32_18 : i32 to vector<8x128xi32>
    %28 = arith.cmpi eq, %22, %27 : vector<8x128xi32>
    %cst_19 = arith.constant 0.000000e+00 : f32
    %29 = vector.broadcast %cst_19 : f32 to vector<8x128xf32>
    %30 = arith.select %28, %21, %29 : vector<8x128xi1>, vector<8x128xf32>
    %cst_20 = arith.constant dense<0.000000e+00> : vector<8xf32>
    %31 = vector.multi_reduction <add>, %30, %cst_20 [1] : vector<8x128xf32> to vector<8xf32>
    %32 = vector.shape_cast %31 : vector<8xf32> to vector<8x1xf32>
    %cst_21 = arith.constant dense<0xFF800000> : vector<8xf32>
    %33 = vector.multi_reduction <maximumf>, %26, %cst_21 [1] : vector<8x128xf32> to vector<8xf32>
    %34 = vector.shape_cast %33 : vector<8xf32> to vector<8x1xf32>
    %35 = vector.broadcast %34 : vector<8x1xf32> to vector<8x128xf32>
    %36 = arith.subf %26, %35 : vector<8x128xf32>
    %37 = math.exp %36 : vector<8x128xf32>
    %cst_22 = arith.constant dense<0.000000e+00> : vector<8xf32>
    %38 = vector.multi_reduction <add>, %37, %cst_22 [1] : vector<8x128xf32> to vector<8xf32>
    %39 = vector.shape_cast %38 : vector<8xf32> to vector<8x1xf32>
    %40 = math.log %39 : vector<8x1xf32>
    %41 = arith.addf %34, %40 : vector<8x1xf32>
    %c0_23 = arith.constant 0 : index
    %c0_24 = arith.constant 0 : index
    %42 = vector.load %arg2[%c0_23, %c0_24] : memref<8x128xf32, #tpu.memory_space<vmem>>, vector<8x128xf32>
    %43 = arith.addf %26, %42 : vector<8x128xf32>
    %cst_25 = arith.constant dense<0xFF800000> : vector<8xf32>
    %44 = vector.multi_reduction <maximumf>, %43, %cst_25 [1] : vector<8x128xf32> to vector<8xf32>
    %45 = vector.shape_cast %44 : vector<8xf32> to vector<8x1xf32>
    %46 = vector.broadcast %45 : vector<8x1xf32> to vector<8x128xf32>
    %47 = arith.cmpf oeq, %43, %46 : vector<8x128xf32>
    %c128_i32 = arith.constant 128 : i32
    %48 = vector.broadcast %c128_i32 : i32 to vector<8x128xi32>
    %49 = arith.select %47, %22, %48 : vector<8x128xi1>, vector<8x128xi32>
    %cst_26 = arith.constant dense<2147483647> : vector<8xi32>
    %50 = vector.multi_reduction <minsi>, %49, %cst_26 [1] : vector<8x128xi32> to vector<8xi32>
    %51 = vector.shape_cast %50 : vector<8xi32> to vector<8x1xi32>
    %52 = vector.broadcast %51 : vector<8x1xi32> to vector<8x128xi32>
    %53 = arith.cmpi eq, %22, %52 : vector<8x128xi32>
    %cst_27 = arith.constant 0.000000e+00 : f32
    %54 = vector.broadcast %cst_27 : f32 to vector<8x128xf32>
    %55 = arith.select %53, %21, %54 : vector<8x128xi1>, vector<8x128xf32>
    %cst_28 = arith.constant dense<0.000000e+00> : vector<8xf32>
    %56 = vector.multi_reduction <add>, %55, %cst_28 [1] : vector<8x128xf32> to vector<8xf32>
    %57 = vector.shape_cast %56 : vector<8xf32> to vector<8x1xf32>
    %58 = arith.subf %57, %41 : vector<8x1xf32>
    %59 = arith.sitofp %51 : vector<8x1xi32> to vector<8x1xf32>
    %c0_i32 = arith.constant 0 : i32
    %60 = vector.broadcast %c0_i32 : i32 to vector<8x128xi32>
    %61 = arith.cmpi eq, %22, %60 : vector<8x128xi32>
    %cst_29 = arith.constant 0.000000e+00 : f32
    %62 = vector.shape_cast %32 : vector<8x1xf32> to vector<8x1xf32>
    %63 = vector.broadcast %62 : vector<8x1xf32> to vector<8x128xf32>
    %64 = vector.broadcast %cst_29 : f32 to vector<8x128xf32>
    %65 = arith.select %61, %63, %64 : vector<8x128xi1>, vector<8x128xf32>
    %c1_i32 = arith.constant 1 : i32
    %66 = vector.broadcast %c1_i32 : i32 to vector<8x128xi32>
    %67 = arith.cmpi eq, %22, %66 : vector<8x128xi32>
    %cst_30 = arith.constant 0.000000e+00 : f32
    %68 = vector.shape_cast %58 : vector<8x1xf32> to vector<8x1xf32>
    %69 = vector.broadcast %68 : vector<8x1xf32> to vector<8x128xf32>
    %70 = vector.broadcast %cst_30 : f32 to vector<8x128xf32>
    %71 = arith.select %67, %69, %70 : vector<8x128xi1>, vector<8x128xf32>
    %72 = arith.addf %65, %71 : vector<8x128xf32>
    %c2_i32 = arith.constant 2 : i32
    %73 = vector.broadcast %c2_i32 : i32 to vector<8x128xi32>
    %74 = arith.cmpi eq, %22, %73 : vector<8x128xi32>
    %cst_31 = arith.constant 0.000000e+00 : f32
    %75 = vector.shape_cast %59 : vector<8x1xf32> to vector<8x1xf32>
    %76 = vector.broadcast %75 : vector<8x1xf32> to vector<8x128xf32>
    %77 = vector.broadcast %cst_31 : f32 to vector<8x128xf32>
    %78 = arith.select %74, %76, %77 : vector<8x128xi1>, vector<8x128xf32>
    %79 = arith.addf %72, %78 : vector<8x128xf32>
    %c0_32 = arith.constant 0 : index
    %c0_33 = arith.constant 0 : index
    %80 = vector.load %arg9[%c0_32, %c0_33] : memref<8x128xf32, #tpu.memory_space<vmem>>, vector<8x128xf32>
    tpu.vector_store %arg9[%c0_32, %c0_33], %79 {strides = array<i32>} : memref<8x128xf32, #tpu.memory_space<vmem>>, vector<8x128xf32>,
    return
  }
  func.func @transform_0(%arg0: i32) -> (i32, i32) {
    %c0_i32 = arith.constant 0 : i32
    %c0_i32_0 = arith.constant 0 : i32
    return %arg0, %c0_i32 : i32, i32
  }
  func.func @transform_1(%arg0: i32) -> (i32, i32) {
    %c0_i32 = arith.constant 0 : i32
    %c0_i32_0 = arith.constant 0 : i32
    return %arg0, %c0_i32 : i32, i32
  }
  func.func @transform_2(%arg0: i32) -> (i32, i32) {
    %c0_i32 = arith.constant 0 : i32
    %c0_i32_0 = arith.constant 0 : i32
    %c0_i32_1 = arith.constant 0 : i32
    return %c0_i32, %c0_i32_0 : i32, i32
  }
  func.func @transform_3(%arg0: i32) -> (i32, i32) {
    %c0_i32 = arith.constant 0 : i32
    %c0_i32_0 = arith.constant 0 : i32
    %c0_i32_1 = arith.constant 0 : i32
    return %c0_i32, %c0_i32_0 : i32, i32
  }
  func.func @transform_4(%arg0: i32) -> (i32, i32) {
    %c0_i32 = arith.constant 0 : i32
    %c0_i32_0 = arith.constant 0 : i32
    %c0_i32_1 = arith.constant 0 : i32
    return %c0_i32, %c0_i32_0 : i32, i32
  }
  func.func @transform_5(%arg0: i32) -> (i32, i32) {
    %c0_i32 = arith.constant 0 : i32
    %c0_i32_0 = arith.constant 0 : i32
    %c0_i32_1 = arith.constant 0 : i32
    return %c0_i32, %c0_i32_0 : i32, i32
  }
  func.func @transform_6(%arg0: i32) -> (i32, i32) {
    %c0_i32 = arith.constant 0 : i32
    %c0_i32_0 = arith.constant 0 : i32
    %c0_i32_1 = arith.constant 0 : i32
    return %c0_i32, %c0_i32_0 : i32, i32
  }
  func.func @transform_7(%arg0: i32) -> (i32, i32) {
    %c0_i32 = arith.constant 0 : i32
    %c0_i32_0 = arith.constant 0 : i32
    %c0_i32_1 = arith.constant 0 : i32
    return %c0_i32, %c0_i32_0 : i32, i32
  }
  func.func @transform_8(%arg0: i32) -> (i32, i32) {
    %c0_i32 = arith.constant 0 : i32
    %c0_i32_0 = arith.constant 0 : i32
    return %arg0, %c0_i32 : i32, i32
  }
}

</mosaic_0001>

<llo_original>
// kernel: tpu_custom_call.1
$region0: #{tpu_custom_call.1}
  #allocation0 [shape = 'u32[]', space=smem, size = 0x4, offset = 0x4, fixed_abs, tag = 'smem constant byte address 0x4 - core index']
  #allocation1 [shape = 'u32[144,128]{1,0:T(1,128)}', space=vmem, size = 0x12000, scoped, tag = 'internal scratch']
  %s0 = inlined_call_operand.hbm [shape: bf16[8,32], index: 0, kind: input, shape index: {}]
  %s1 = inlined_call_operand.hbm [shape: f32[8,128], index: 1, kind: input, shape index: {}]
  %s2 = inlined_call_operand.hbm [shape: bf16[32,128], index: 2, kind: input, shape index: {}]
  %s3 = inlined_call_operand.vmem [shape: f32[1,128], index: 3, kind: input, shape index: {}]
  %s4 = inlined_call_operand.hbm [shape: bf16[128,128], index: 4, kind: input, shape index: {}]
  %s5 = inlined_call_operand.vmem [shape: f32[1,128], index: 5, kind: input, shape index: {}]
  %s6 = inlined_call_operand.hbm [shape: bf16[128,128], index: 6, kind: input, shape index: {}]
  %s7 = inlined_call_operand.vmem [shape: f32[1,128], index: 7, kind: input, shape index: {}]
  %s8 = inlined_call_operand.hbm [shape: f32[8,128], index: 8, kind: output, shape index: {}]
  %s9 = sld [smem:[#allocation0]]
  $region62: #{tpu_custom_call.1} parent=0
    _
  %s11 = ssub.s32 1, %s9
  %s12 = scalar_select 0, %s11, %s9
  $region1: #{tpu_custom_call.1} parent=0
    #allocation2 [shape = 'u8[2048]{0}', space=vmem, size = 0x800, scoped, tag = 'input window, operand 0, single buffered']
    #allocation3 [shape = 's32[1]{0}', space=sflag, size = 0x4, scoped, tag = 'scoped memory for tpu_custom_call.1']
    #allocation4 [shape = 's32[1]{0}', space=sflag, size = 0x4, scoped, tag = 'scoped memory for tpu_custom_call.1']
    #allocation5 [shape = 'u8[4096]{0}', space=vmem, size = 0x1000, scoped, tag = 'input window, operand 1, single buffered']
    #allocation6 [shape = 's32[1]{0}', space=sflag, size = 0x4, scoped, tag = 'scoped memory for tpu_custom_call.1']
    #allocation7 [shape = 'u8[8192]{0}', space=vmem, size = 0x2000, scoped, tag = 'input window, operand 2, single buffered']
    #allocation8 [shape = 'u8[32768]{0}', space=vmem, size = 0x8000, scoped, tag = 'input window, operand 4, single buffered']
    #allocation9 [shape = 's32[1]{0}', space=sflag, size = 0x4, scoped, tag = 'scoped memory for tpu_custom_call.1']
    #allocation10 [shape = 'u8[32768]{0}', space=vmem, size = 0x8000, scoped, tag = 'input window, operand 6, single buffered']
    #allocation11 [shape = 'u8[4096]{0}', space=vmem, size = 0x1000, scoped, tag = 'output window, operand 0, single buffered']
    %13 = vsyncpa [#allocation3], 0
    %14 = vsyncpa [#allocation6], 0
    %15 = vsyncpa [#allocation9], 0
    %16 = vsyncpa [#allocation4], 0
    // Predicated region
    $region2: #{tpu_custom_call.1} parent=1 // pred_check
      _
    $region3: #{tpu_custom_call.1} parent=1 // pred_check_branch
      %18 = sbr.rel (0) target = $region5
    $region4: #{tpu_custom_call.1} parent=1 // pred_region
      %s20 = ssub.s32 64, 64
      %21 = vsyncadd [#allocation3], %s20
      %s23 = sshll.u32 [#allocation2], 4
      %s24 = int_to_ptr.vmem [resolvable:$true] %s23
      %26 = dma.hbm_to_vmem [thread:$0]  %s0, 64, %s24, [#allocation3]
    $region5: #{tpu_custom_call.1} parent=1 // pred_fallthru
      _
    // Predicated region
    $region6: #{tpu_custom_call.1} parent=1 // pred_check
      _
    $region7: #{tpu_custom_call.1} parent=1 // pred_check_branch
      %28 = sbr.rel (0) target = $region9
    $region8: #{tpu_custom_call.1} parent=1 // pred_region
      %s30 = ssub.s32 128, 128
      %31 = vsyncadd [#allocation6], %s30
      %s33 = sshll.u32 [#allocation5], 4
      %s34 = int_to_ptr.vmem [resolvable:$true] %s33
      %36 = dma.hbm_to_vmem [thread:$0]  %s1, 128, %s34, [#allocation6]
    $region9: #{tpu_custom_call.1} parent=1 // pred_fallthru
      _
    // Predicated region
    $region10: #{tpu_custom_call.1} parent=1 // pred_check
      _
    $region11: #{tpu_custom_call.1} parent=1 // pred_check_branch
      %38 = sbr.rel (0) target = $region13
    $region12: #{tpu_custom_call.1} parent=1 // pred_region
      %s40 = ssub.s32 256, 256
      %41 = vsyncadd [#allocation6], %s40
      %s42 = sshll.u32 [#allocation7], 4
      %s43 = int_to_ptr.vmem [resolvable:$true] %s42
      %48 = dma.hbm_to_vmem [thread:$0]  %s2, 256, %s43, [#allocation6], 64, 64, 4
    $region13: #{tpu_custom_call.1} parent=1 // pred_fallthru
      _
    // Predicated region
    $region14: #{tpu_custom_call.1} parent=1 // pred_check
      _
    $region15: #{tpu_custom_call.1} parent=1 // pred_check_branch
      %50 = sbr.rel (0) target = $region17
    $region16: #{tpu_custom_call.1} parent=1 // pred_region
      _
    $region17: #{tpu_custom_call.1} parent=1 // pred_fallthru
      _
    // Predicated region
    $region18: #{tpu_custom_call.1} parent=1 // pred_check
      _
    $region19: #{tpu_custom_call.1} parent=1 // pred_check_branch
      %52 = sbr.rel (0) target = $region21
    $region20: #{tpu_custom_call.1} parent=1 // pred_region
      %s54 = ssub.s32 1024, 1024
      %55 = vsyncadd [#allocation9], %s54
      %s56 = sshll.u32 [#allocation8], 4
      %s57 = int_to_ptr.vmem [resolvable:$true] %s56
      %62 = dma.hbm_to_vmem [thread:$0]  %s4, 1024, %s57, [#allocation9], 64, 64, 4
    $region21: #{tpu_custom_call.1} parent=1 // pred_fallthru
      _
    // Predicated region
    $region22: #{tpu_custom_call.1} parent=1 // pred_check
      _
    $region23: #{tpu_custom_call.1} parent=1 // pred_check_branch
      %64 = sbr.rel (0) target = $region25
    $region24: #{tpu_custom_call.1} parent=1 // pred_region
      _
    $region25: #{tpu_custom_call.1} parent=1 // pred_fallthru
      _
    // Predicated region
    $region26: #{tpu_custom_call.1} parent=1 // pred_check
      _
    $region27: #{tpu_custom_call.1} parent=1 // pred_check_branch
      %66 = sbr.rel (0) target = $region29
    $region28: #{tpu_custom_call.1} parent=1 // pred_region
      %s68 = ssub.s32 1024, 1024
      %69 = vsyncadd [#allocation9], %s68
      %s70 = sshll.u32 [#allocation10], 4
      %s71 = int_to_ptr.vmem [resolvable:$true] %s70
      %76 = dma.hbm_to_vmem [thread:$0]  %s6, 1024, %s71, [#allocation9], 64, 64, 4
    $region29: #{tpu_custom_call.1} parent=1 // pred_fallthru
      _
    // Predicated region
    $region30: #{tpu_custom_call.1} parent=1 // pred_check
      _
    $region31: #{tpu_custom_call.1} parent=1 // pred_check_branch
      %78 = sbr.rel (0) target = $region33
    $region32: #{tpu_custom_call.1} parent=1 // pred_region
      _
    $region33: #{tpu_custom_call.1} parent=1 // pred_fallthru
      _
    // Predicated region
    $region34: #{tpu_custom_call.1} parent=1 // pred_check
      _
    $region35: #{tpu_custom_call.1} parent=1 // pred_check_branch
      %80 = sbr.rel (0) target = $region37
    $region36: #{tpu_custom_call.1} parent=1 // pred_region
      %81 = dma.done [#allocation3], 64
    $region37: #{tpu_custom_call.1} parent=1 // pred_fallthru
      _
    // Predicated region
    $region38: #{tpu_custom_call.1} parent=1 // pred_check
      _
    $region39: #{tpu_custom_call.1} parent=1 // pred_check_branch
      %83 = sbr.rel (0) target = $region41
    $region40: #{tpu_custom_call.1} parent=1 // pred_region
      %84 = dma.done [#allocation6], 128
    $region41: #{tpu_custom_call.1} parent=1 // pred_fallthru
      _
    // Predicated region
    $region42: #{tpu_custom_call.1} parent=1 // pred_check
      _
    $region43: #{tpu_custom_call.1} parent=1 // pred_check_branch
      %86 = sbr.rel (0) target = $region45
    $region44: #{tpu_custom_call.1} parent=1 // pred_region
      %87 = dma.done [#allocation6], 256
    $region45: #{tpu_custom_call.1} parent=1 // pred_fallthru
      _
    // Predicated region
    $region46: #{tpu_custom_call.1} parent=1 // pred_check
      _
    $region47: #{tpu_custom_call.1} parent=1 // pred_check_branch
      %89 = sbr.rel (0) target = $region49
    $region48: #{tpu_custom_call.1} parent=1 // pred_region
      %90 = dma.done [#allocation9], 1024
    $region49: #{tpu_custom_call.1} parent=1 // pred_fallthru
      _
    // Predicated region
    $region50: #{tpu_custom_call.1} parent=1 // pred_check
      _
    $region51: #{tpu_custom_call.1} parent=1 // pred_check_branch
      %92 = sbr.rel (0) target = $region53
    $region52: #{tpu_custom_call.1} parent=1 // pred_region
      %93 = dma.done [#allocation9], 1024
    $region53: #{tpu_custom_call.1} parent=1 // pred_fallthru
      _
    %v95 = vld [vmem:[#allocation2] sm:$0xf]
    %v96 = vld [vmem:[#allocation7] sm:$0xf]
    %v97 = vld [vmem:[#allocation7 + $0x4] sm:$0xf]
    %v98 = vld [vmem:[#allocation7 + $0x8] sm:$0xf]
    %v99 = vld [vmem:[#allocation7 + $0xc] sm:$0xf]
    %v100 = vld [vmem:[%s3] sm:$0x1]
    %v102 = vlaneseq
    %v103 = vshrl.u32 %v102, 7
    %v104 = vsub.s32 0, %v103
    %v105 = vrot.slane %v100, %v104
    %v111 = vunpack.c.l.b16 %v96
    %v112 = vunpack.c.l.b16 %v97
    %v113 = vunpack.c.l.b16 %v98
    %v114 = vunpack.c.l.b16 %v99
    %v115 = vpack.c.b16 %v112, %v111
    %v116 = vpack.c.b16 %v114, %v113
    %vm119 = vcmask 261120
    %v121 = vsel %vm119, %v95, 0
    %123 = vmatprep.subr.bf16.mxu0 0
    %124 = vmatpush1.bf16.msra.mxu0 0
    %125 = vmatprep.subr.bf16.mxu0 0
    %126 = vmatpush1.bf16.msra.mxu0 0
    %127 = vmatprep.subr.bf16.mxu0 0
    %128 = vmatpush1.bf16.msra.mxu0 0
    %129 = vmatprep.subr.bf16.mxu0 0
    %130 = vmatpush1.bf16.msra.mxu0 0
    %131 = vmatprep.subr.bf16.mxu0 0
    %132 = vmatpush1.bf16.msra.mxu0 0
    %133 = vmatprep.subr.bf16.mxu0 0
    %134 = vmatpush1.bf16.msra.mxu0 0
    %135 = vmatprep.subr.bf16.mxu0 0
    %136 = vmatpush1.bf16.msra.mxu0 %v116
    %137 = vmatprep.subr.bf16.mxu0 0
    %138 = vmatpush1.bf16.msra.mxu0 %v115
    %139 = vmatprep.subr.bf16.mxu0 0
    %140 = vmatpush2.bf16.msra.mxu0 0
    %141 = vmatprep.subr.bf16.mxu0 0
    %142 = vmatpush2.bf16.msra.mxu0 0
    %143 = vmatprep.subr.bf16.mxu0 0
    %144 = vmatpush2.bf16.msra.mxu0 0
    %145 = vmatprep.subr.bf16.mxu0 0
    %146 = vmatpush2.bf16.msra.mxu0 0
    %147 = vmatprep.subr.bf16.mxu0 0
    %148 = vmatpush2.bf16.msra.mxu0 0
    %149 = vmatprep.subr.bf16.mxu0 0
    %150 = vmatpush2.bf16.msra.mxu0 0
    %151 = vmatprep.subr.bf16.mxu0 0
    %152 = vmatpush2.bf16.msra.mxu0 0
    %153 = vmatprep.subr.bf16.mxu0 0
    %154 = vmatpush2.bf16.msra.mxu0 0
    %155 = vmatprep.mubr.bf16.mxu0 0
    %156 = vmatmul.mubr.bf16.gmra.mxu0 %v121
    %v157 = vpop.f32.mrf.mxu0
    %v158 = vadd.f32 %v105, %v157
    %v159 = vpop.f32.mrf.mxu0
    %v160 = vpop.f32.mrf.mxu0
    %v161 = vpop.f32.mrf.mxu0
    %162 = vdwg.mxu0
    %v163 = vmax.f32 %v158, 0.0
    %v164 = vpack.c.bf16 %v163, %v163
    %v165 = vld [vmem:[#allocation8] sm:$0xf]
    %v166 = vld [vmem:[#allocation8 + $0x4] sm:$0xf]
    %v167 = vld [vmem:[#allocation8 + $0x8] sm:$0xf]
    %v168 = vld [vmem:[#allocation8 + $0xc] sm:$0xf]
    %v169 = vld [vmem:[#allocation8 + $0x10] sm:$0xf]
    %v170 = vld [vmem:[#allocation8 + $0x14] sm:$0xf]
    %v171 = vld [vmem:[#allocation8 + $0x18] sm:$0xf]
    %v172 = vld [vmem:[#allocation8 + $0x1c] sm:$0xf]
    %v173 = vld [vmem:[#allocation8 + $0x20] sm:$0xf]
    %v174 = vld [vmem:[#allocation8 + $0x24] sm:$0xf]
    %v175 = vld [vmem:[#allocation8 + $0x28] sm:$0xf]
    %v176 = vld [vmem:[#allocation8 + $0x2c] sm:$0xf]
    %v177 = vld [vmem:[#allocation8 + $0x30] sm:$0xf]
    %v178 = vld [vmem:[#allocation8 + $0x34] sm:$0xf]
    %v179 = vld [vmem:[#allocation8 + $0x38] sm:$0xf]
    %v180 = vld [vmem:[#allocation8 + $0x3c] sm:$0xf]
    %v181 = vld [vmem:[%s5] sm:$0x1]
    %v183 = vlaneseq
    %v184 = vshrl.u32 %v183, 7
    %v185 = vsub.s32 0, %v184
    %v186 = vrot.slane %v181, %v185
    %v204 = vunpack.c.l.b16 %v165
    %v205 = vunpack.c.l.b16 %v166
    %v206 = vunpack.c.l.b16 %v167
    %v207 = vunpack.c.l.b16 %v168
    %v208 = vunpack.c.l.b16 %v169
    %v209 = vunpack.c.l.b16 %v170
    %v210 = vunpack.c.l.b16 %v171
    %v211 = vunpack.c.l.b16 %v172
    %v212 = vunpack.c.l.b16 %v173
    %v213 = vunpack.c.l.b16 %v174
    %v214 = vunpack.c.l.b16 %v175
    %v215 = vunpack.c.l.b16 %v176
    %v216 = vunpack.c.l.b16 %v177
    %v217 = vunpack.c.l.b16 %v178
    %v218 = vunpack.c.l.b16 %v179
    %v219 = vunpack.c.l.b16 %v180
    %v220 = vpack.c.b16 %v205, %v204
    %v221 = vpack.c.b16 %v207, %v206
    %v222 = vpack.c.b16 %v209, %v208
    %v223 = vpack.c.b16 %v211, %v210
    %v224 = vpack.c.b16 %v213, %v212
    %v225 = vpack.c.b16 %v215, %v214
    %v226 = vpack.c.b16 %v217, %v216
    %v227 = vpack.c.b16 %v219, %v218
    %236 = vmatprep.subr.bf16.mxu0 0
    %237 = vmatpush1.bf16.msra.mxu0 %v227
    %238 = vmatprep.subr.bf16.mxu0 0
    %239 = vmatpush1.bf16.msra.mxu0 %v226
    %240 = vmatprep.subr.bf16.mxu0 0
    %241 = vmatpush1.bf16.msra.mxu0 %v225
    %242 = vmatprep.subr.bf16.mxu0 0
    %243 = vmatpush1.bf16.msra.mxu0 %v224
    %244 = vmatprep.subr.bf16.mxu0 0
    %245 = vmatpush1.bf16.msra.mxu0 %v223
    %246 = vmatprep.subr.bf16.mxu0 0
    %247 = vmatpush1.bf16.msra.mxu0 %v222
    %248 = vmatprep.subr.bf16.mxu0 0
    %249 = vmatpush1.bf16.msra.mxu0 %v221
    %250 = vmatprep.subr.bf16.mxu0 0
    %251 = vmatpush1.bf16.msra.mxu0 %v220
    %252 = vmatprep.subr.bf16.mxu0 0
    %253 = vmatpush2.bf16.msra.mxu0 0
    %254 = vmatprep.subr.bf16.mxu0 0
    %255 = vmatpush2.bf16.msra.mxu0 0
    %256 = vmatprep.subr.bf16.mxu0 0
    %257 = vmatpush2.bf16.msra.mxu0 0
    %258 = vmatprep.subr.bf16.mxu0 0
    %259 = vmatpush2.bf16.msra.mxu0 0
    %260 = vmatprep.subr.bf16.mxu0 0
    %261 = vmatpush2.bf16.msra.mxu0 0
    %262 = vmatprep.subr.bf16.mxu0 0
    %263 = vmatpush2.bf16.msra.mxu0 0
    %264 = vmatprep.subr.bf16.mxu0 0
    %265 = vmatpush2.bf16.msra.mxu0 0
    %266 = vmatprep.subr.bf16.mxu0 0
    %267 = vmatpush2.bf16.msra.mxu0 0
    %268 = vmatprep.mubr.bf16.mxu0 0
    %269 = vmatmul.mubr.bf16.gmra.mxu0 %v164
    %v270 = vpop.f32.mrf.mxu0
    %v271 = vadd.f32 %v186, %v270
    %v272 = vpop.f32.mrf.mxu0
    %v273 = vpop.f32.mrf.mxu0
    %v274 = vpop.f32.mrf.mxu0
    %275 = vdwg.mxu0
    %v276 = vmax.f32 %v271, 0.0
    %v277 = vpack.c.bf16 %v276, %v276
    %v278 = vld [vmem:[#allocation10] sm:$0xf]
    %v279 = vld [vmem:[#allocation10 + $0x4] sm:$0xf]
    %v280 = vld [vmem:[#allocation10 + $0x8] sm:$0xf]
    %v281 = vld [vmem:[#allocation10 + $0xc] sm:$0xf]
    %v282 = vld [vmem:[#allocation10 + $0x10] sm:$0xf]
    %v283 = vld [vmem:[#allocation10 + $0x14] sm:$0xf]
    %v284 = vld [vmem:[#allocation10 + $0x18] sm:$0xf]
    %v285 = vld [vmem:[#allocation10 + $0x1c] sm:$0xf]
    %v286 = vld [vmem:[#allocation10 + $0x20] sm:$0xf]
    %v287 = vld [vmem:[#allocation10 + $0x24] sm:$0xf]
    %v288 = vld [vmem:[#allocation10 + $0x28] sm:$0xf]
    %v289 = vld [vmem:[#allocation10 + $0x2c] sm:$0xf]
    %v290 = vld [vmem:[#allocation10 + $0x30] sm:$0xf]
    %v291 = vld [vmem:[#allocation10 + $0x34] sm:$0xf]
    %v292 = vld [vmem:[#allocation10 + $0x38] sm:$0xf]
    %v293 = vld [vmem:[#allocation10 + $0x3c] sm:$0xf]
    %v294 = vld [vmem:[%s7] sm:$0x1]
    %v296 = vlaneseq
    %v297 = vshrl.u32 %v296, 7
    %v298 = vsub.s32 0, %v297
    %v299 = vrot.slane %v294, %v298
    %v317 = vunpack.c.l.b16 %v278
    %v318 = vunpack.c.l.b16 %v279
    %v319 = vunpack.c.l.b16 %v280
    %v320 = vunpack.c.l.b16 %v281
    %v321 = vunpack.c.l.b16 %v282
    %v322 = vunpack.c.l.b16 %v283
    %v323 = vunpack.c.l.b16 %v284
    %v324 = vunpack.c.l.b16 %v285
    %v325 = vunpack.c.l.b16 %v286
    %v326 = vunpack.c.l.b16 %v287
    %v327 = vunpack.c.l.b16 %v288
    %v328 = vunpack.c.l.b16 %v289
    %v329 = vunpack.c.l.b16 %v290
    %v330 = vunpack.c.l.b16 %v291
    %v331 = vunpack.c.l.b16 %v292
    %v332 = vunpack.c.l.b16 %v293
    %v333 = vpack.c.b16 %v318, %v317
    %v334 = vpack.c.b16 %v320, %v319
    %v335 = vpack.c.b16 %v322, %v321
    %v336 = vpack.c.b16 %v324, %v323
    %v337 = vpack.c.b16 %v326, %v325
    %v338 = vpack.c.b16 %v328, %v327
    %v339 = vpack.c.b16 %v330, %v329
    %v340 = vpack.c.b16 %v332, %v331
    %349 = vmatprep.subr.bf16.mxu0 0
    %350 = vmatpush1.bf16.msra.mxu0 %v340
    %351 = vmatprep.subr.bf16.mxu0 0
    %352 = vmatpush1.bf16.msra.mxu0 %v339
    %353 = vmatprep.subr.bf16.mxu0 0
    %354 = vmatpush1.bf16.msra.mxu0 %v338
    %355 = vmatprep.subr.bf16.mxu0 0
    %356 = vmatpush1.bf16.msra.mxu0 %v337
    %357 = vmatprep.subr.bf16.mxu0 0
    %358 = vmatpush1.bf16.msra.mxu0 %v336
    %359 = vmatprep.subr.bf16.mxu0 0
    %360 = vmatpush1.bf16.msra.mxu0 %v335
    %361 = vmatprep.subr.bf16.mxu0 0
    %362 = vmatpush1.bf16.msra.mxu0 %v334
    %363 = vmatprep.subr.bf16.mxu0 0
    %364 = vmatpush1.bf16.msra.mxu0 %v333
    %365 = vmatprep.subr.bf16.mxu0 0
    %366 = vmatpush2.bf16.msra.mxu0 0
    %367 = vmatprep.subr.bf16.mxu0 0
    %368 = vmatpush2.bf16.msra.mxu0 0
    %369 = vmatprep.subr.bf16.mxu0 0
    %370 = vmatpush2.bf16.msra.mxu0 0
    %371 = vmatprep.subr.bf16.mxu0 0
    %372 = vmatpush2.bf16.msra.mxu0 0
    %373 = vmatprep.subr.bf16.mxu0 0
    %374 = vmatpush2.bf16.msra.mxu0 0
    %375 = vmatprep.subr.bf16.mxu0 0
    %376 = vmatpush2.bf16.msra.mxu0 0
    %377 = vmatprep.subr.bf16.mxu0 0
    %378 = vmatpush2.bf16.msra.mxu0 0
    %379 = vmatprep.subr.bf16.mxu0 0
    %380 = vmatpush2.bf16.msra.mxu0 0
    %381 = vmatprep.mubr.bf16.mxu0 0
    %382 = vmatmul.mubr.bf16.gmra.mxu0 %v277
    %v383 = vpop.f32.mrf.mxu0
    %v384 = vadd.f32 %v299, %v383
    %v385 = vpop.f32.mrf.mxu0
    %v386 = vpop.f32.mrf.mxu0
    %v387 = vpop.f32.mrf.mxu0
    %388 = vdwg.mxu0
    %v389 = vlaneseq
    %v390 = vand.u32 %v389, 127
    %vm391 = vcmp.lt.s32.totalorder %v390, 6
    %v392 = vsel %vm391, %v384, -1e+30
    %vm393 = vcmp.eq.s32.totalorder %v390, 6
    %v394 = vsel %vm393, %v384, 0.0
    %395 = vadd.xlane.f32.xlu0 %v394
    %v396 = vpop.xlane.xlu0 %395
    %397 = vmax.xlane.f32.xlu0 %v392
    %v398 = vpop.xlane.xlu0 %397
    %v399 = vsub.f32 %v392, %v398
    %v400 = vmul.f32 %v399, 1.442695
    %v401 = vpow.pop %v400
    %402 = vadd.xlane.f32.xlu0 %v401
    %v403 = vpop.xlane.xlu0 %402
    %v404 = vlog2.pop %v403
    %v405 = vmul.f32 %v404, 0.6931472
    %v406 = vadd.f32 %v398, %v405
    %v407 = vld [vmem:[#allocation5] sm:$0xff]
    %v408 = vadd.f32 %v392, %v407
    %409 = vmax.xlane.f32.xlu0 %v408
    %v410 = vpop.xlane.xlu0 %409
    %vm411 = vcmp.eq.f32.partialorder %v408, %v410
    %v412 = vsel %vm411, %v390, 128
    %v413 = vand.u32 %v412, 65535
    %v414 = vshra.s32 %v412, 16
    %v415 = vcvt.s32.f32 %v413
    %v416 = vcvt.s32.f32 %v414
    %417 = vmin.xlane.f32.xlu0 %v416
    %v418 = vpop.xlane.xlu0 %417
    %vm419 = vcmp.eq.f32.partialorder %v416, %v418
    %v420 = vsel %vm419, %v415, inf
    %421 = vmin.xlane.f32.xlu0 %v420
    %v422 = vpop.xlane.xlu0 %421
    %v423 = vcvt.f32.s32 %v422
    %v424 = vcvt.f32.s32 %v418
    %v425 = vshll.u32 %v424, 16
    %v426 = vadd.s32 %v425, %v423
    %vm427 = vcmp.eq.s32.totalorder %v390, %v426
    %v428 = vsel %vm427, %v384, 0.0
    %429 = vadd.xlane.f32.xlu0 %v428
    %v430 = vpop.xlane.xlu0 %429
    %v431 = vsub.f32 %v430, %v406
    %v432 = vcvt.s32.f32 %v426
    %vm433 = vcmp.eq.s32.totalorder %v390, 0
    %v434 = vsel %vm433, %v396, 0.0
    %vm435 = vcmp.eq.s32.totalorder %v390, 1
    %v436 = vsel %vm435, %v431, 0.0
    %v437 = vadd.f32 %v434, %v436
    %vm438 = vcmp.eq.s32.totalorder %v390, 2
    %v439 = vsel %vm438, %v432, 0.0
    %v440 = vadd.f32 %v437, %v439
    %441 = vst [vmem:[#allocation11] sm:$0xff] %v440
    // Predicated region
    $region54: #{tpu_custom_call.1} parent=1 // pred_check
      _
    $region55: #{tpu_custom_call.1} parent=1 // pred_check_branch
      %443 = sbr.rel (0) target = $region57
    $region56: #{tpu_custom_call.1} parent=1 // pred_region
      %s445 = ssub.s32 128, 128
      %446 = vsyncadd [#allocation4], %s445
      %s448 = sshll.u32 [#allocation11], 4
      %s449 = int_to_ptr.vmem [resolvable:$true] %s448
      %451 = dma.vmem_to_hbm [thread:$0]  %s449, 128, %s8, [#allocation4]
    $region57: #{tpu_custom_call.1} parent=1 // pred_fallthru
      _
    // Predicated region
    $region58: #{tpu_custom_call.1} parent=1 // pred_check
      _
    $region59: #{tpu_custom_call.1} parent=1 // pred_check_branch
      %453 = sbr.rel (0) target = $region61
    $region60: #{tpu_custom_call.1} parent=1 // pred_region
      %454 = dma.done [#allocation4], 128
    $region61: #{tpu_custom_call.1} parent=1 // pred_fallthru
      _
    %455 = vsyncpa [#allocation3], 1
    %456 = vsyncpa [#allocation6], 1
    %457 = vsyncpa [#allocation9], 1
    %458 = vsyncpa [#allocation4], 1

</llo_original>
